<compile_context>
chip_gen: v6e
topology: v6e:2x2x1
jax: 0.10.0
libtpu: 0.0.40
codegen_flags: <defaults>
</compile_context>

<pallas_src>
import jax
import jax.numpy as jnp
from jax.experimental import pallas as pl
from jax.experimental.pallas import tpu as pltpu

HIDDEN = 16        # `size = 16` inside make_sequence
LANE = 128         # TPU lane width
NEG_INF = -1e30    # padded-action logit bias -> exp() == 0


def _round_up(x, m):
    return (x + m - 1) // m * m


def _actor_kernel(x_ref, w_ref, b_ref, out_ref):
    # x_ref: (Bt, D) padded states; w_ref: (3, D, D) stacked padded weights;
    # b_ref: (8, D) packed biases (rows 0/1/2 = b1/b2/b3, b3 padded with -1e30).
    x = x_ref[...]
    h1 = jnp.tanh(
        jnp.dot(x, w_ref[0], preferred_element_type=jnp.float32) + b_ref[0:1, :]
    )
    h2 = jnp.tanh(
        jnp.dot(h1, w_ref[1], preferred_element_type=jnp.float32) + b_ref[1:2, :]
    )
    logits = (
        jnp.dot(h2, w_ref[2], preferred_element_type=jnp.float32) + b_ref[2:3, :]
    )
    # softmax over the (padded) action lanes; padded lanes are -1e30 -> prob 0
    m = jnp.max(logits, axis=-1, keepdims=True)
    e = jnp.exp(logits - m)
    s = jnp.sum(e, axis=-1, keepdims=True)
    out_ref[...] = e * pl.reciprocal(s, approx=True)


def pack_actor_params(params, state_size, action_size):
    """Pad + pack (w1,b1,w2,b2,w3,b3) into lane-dense kernel operands."""
    w1, b1, w2, b2, w3, b3 = params
    D = max(
        _round_up(state_size, LANE),
        _round_up(HIDDEN, LANE),
        _round_up(action_size, LANE),
    )

    def pad_w(w):
        k, n = w.shape
        return jnp.zeros((D, D), jnp.float32).at[:k, :n].set(w.astype(jnp.float32))

    w_stack = jnp.stack([pad_w(w1), pad_w(w2), pad_w(w3)])  # (3, D, D)

    bias = jnp.zeros((8, D), jnp.float32)
    bias = bias.at[0, :HIDDEN].set(b1.astype(jnp.float32))
    bias = bias.at[1, :HIDDEN].set(b2.astype(jnp.float32))
    b3_row = jnp.full((D,), NEG_INF, jnp.float32)
    b3_row = b3_row.at[:action_size].set(b3.astype(jnp.float32))
    bias = bias.at[2, :].set(b3_row)

    return (w_stack, bias, int(action_size))


def actor_forward_batched(states, packed, *, block_b=128):
    """states: (B, state_size) f32 -> probs: (B, action_size) f32."""
    w_stack, bias, action_size = packed
    D = w_stack.shape[-1]
    B, S = states.shape

    Bt = min(block_b, _round_up(B, 8))      # batch tile (multiple of 8 sublanes)
    B_pad = _round_up(B, Bt)

    x = jnp.zeros((B_pad, D), jnp.float32).at[:B, :S].set(
        states.astype(jnp.float32)
    )

    probs_pad = pl.pallas_call(
        _actor_kernel,
        out_shape=jax.ShapeDtypeStruct((B_pad, D), jnp.float32),
        grid=(B_pad // Bt,),
        in_specs=[
            pl.BlockSpec((Bt, D), lambda i: (i, 0)),        # per-tile states
            pl.BlockSpec((3, D, D), lambda i: (0, 0, 0)),   # weights (resident)
            pl.BlockSpec((8, D), lambda i: (0, 0)),         # biases  (resident)
        ],
        out_specs=pl.BlockSpec((Bt, D), lambda i: (i, 0)),
        compiler_params=pltpu.CompilerParams(
            dimension_semantics=("parallel",)               # megacore batch split
        ),
    )(x, w_stack, bias)

    return probs_pad[:B, :action_size]


def actor_forward(state, packed):
    """Original module semantics: 1-D state -> 1-D action probabilities."""
    return actor_forward_batched(state[None, :], packed)[0]


def init_actor_params(key, state_size, action_size):
    """Deterministic synthetic init (uniform, roughly like torch's default)."""
    ks = jax.random.split(key, 6)

    def lin(kw, kb, fan_in, fan_out):
        bound = 1.0 / jnp.sqrt(jnp.float32(fan_in))
        w = jax.random.uniform(kw, (fan_in, fan_out), jnp.float32, -bound, bound)
        b = jax.random.uniform(kb, (fan_out,), jnp.float32, -bound, bound)
        return w, b

    w1, b1 = lin(ks[0], ks[1], state_size, HIDDEN)
    w2, b2 = lin(ks[2], ks[3], HIDDEN, HIDDEN)
    w3, b3 = lin(ks[4], ks[5], HIDDEN, action_size)
    return (w1, b1, w2, b2, w3, b3)


# TODO(synk): torch.distributions.Categorical(out) has no Pallas equivalent;
# the kernel returns the probability vectors that parameterize it (sampling,
# e.g. fused Gumbel-max with pltpu.prng_random_bits, could be added in-kernel).

if __name__ == "__main__":
    STATE_SIZE = 4
    ACTION_SIZE = 3
    BATCH = 256

    key = jax.random.PRNGKey(0)
    k_params, k_state, k_batch = jax.random.split(key, 3)

    params = init_actor_params(k_params, STATE_SIZE, ACTION_SIZE)
    packed = pack_actor_params(params, STATE_SIZE, ACTION_SIZE)

    # Single-state path (matches torch's forward on a 1-D state).
    state = jax.random.normal(k_state, (STATE_SIZE,), jnp.float32)
    probs1 = jax.block_until_ready(actor_forward(state, packed))

    # Batched throughput path.
    states = jax.random.normal(k_batch, (BATCH, STATE_SIZE), jnp.float32)
    probsB = jax.block_until_ready(actor_forward_batched(states, packed))

    # Pure-JAX reference of the same forward.
    w1, b1, w2, b2, w3, b3 = params

    def ref_fwd(x):
        h = jnp.tanh(x @ w1 + b1)
        h = jnp.tanh(h @ w2 + b2)
        return jax.nn.softmax(h @ w3 + b3, axis=-1)

    ref1 = ref_fwd(state[None, :])[0]
    refB = ref_fwd(states)

    assert probs1.shape == (ACTION_SIZE,)
    assert probsB.shape == (BATCH, ACTION_SIZE)
    assert jnp.allclose(probs1, ref1, atol=2e-3), (probs1, ref1)
    assert jnp.allclose(probsB, refB, atol=2e-3)
    assert jnp.allclose(jnp.sum(probsB, axis=-1), 1.0, atol=5e-3)

    print("KERNEL_OK")
</pallas_src>

<mosaic_0001>
module attributes {stable_mosaic.version = 11 : i64} {
  func.func @_actor_kernel(%arg0: i32, %arg1: memref<8x128xf32, #tpu.memory_space<vmem>>, %arg2: memref<3x128x128xf32, #tpu.memory_space<vmem>>, %arg3: memref<8x128xf32, #tpu.memory_space<vmem>>, %arg4: memref<8x128xf32, #tpu.memory_space<vmem>>) attributes {dimension_semantics = [#tpu.dimension_semantics<parallel>], iteration_bounds = array<i64: 1>, scalar_prefetch = 0 : i64, scratch_operands = 0 : i64, tpu.core_type = #tpu.core_type<tc>, window_params = [{transform_indices = @transform_0, window_bounds = array<i64: 8, 128>}, {pipeline_mode = #tpu.pipeline_mode<synchronous>, transform_indices = @transform_1, window_bounds = array<i64: 3, 128, 128>}, {pipeline_mode = #tpu.pipeline_mode<synchronous>, transform_indices = @transform_2, window_bounds = array<i64: 8, 128>}, {transform_indices = @transform_3, window_bounds = array<i64: 8, 128>}]} {
    %c0 = arith.constant 0 : index
    %c0_0 = arith.constant 0 : index
    %0 = vector.load %arg1[%c0, %c0_0] : memref<8x128xf32, #tpu.memory_space<vmem>>, vector<8x128xf32>
    %c0_1 = arith.constant 0 : index
    %c0_2 = arith.constant 0 : index
    %c0_3 = arith.constant 0 : index
    %1 = vector.load %arg2[%c0_1, %c0_2, %c0_3] : memref<3x128x128xf32, #tpu.memory_space<vmem>>, vector<1x128x128xf32>
    %2 = vector.shape_cast %1 : vector<1x128x128xf32> to vector<128x128xf32>
    %cst = arith.constant dense<0.000000e+00> : vector<8x128xf32>
    %3 = tpu.matmul %0, %2, %cst {dimension_numbers = #tpu.dot_dimension_numbers<[1], [0], [0], [1], [0, 0, 1, 1], [], []>} : vector<8x128xf32>, vector<128x128xf32>, vector<8x128xf32> -> vector<8x128xf32>
    %c0_4 = arith.constant 0 : index
    %c0_5 = arith.constant 0 : index
    %4 = vector.load %arg3[%c0_4, %c0_5] : memref<8x128xf32, #tpu.memory_space<vmem>>, vector<1x128xf32>
    %5 = vector.broadcast %4 : vector<1x128xf32> to vector<8x128xf32>
    %6 = arith.addf %3, %5 : vector<8x128xf32>
    %7 = math.tanh %6 : vector<8x128xf32>
    %c1 = arith.constant 1 : index
    %c0_6 = arith.constant 0 : index
    %c0_7 = arith.constant 0 : index
    %8 = vector.load %arg2[%c1, %c0_6, %c0_7] : memref<3x128x128xf32, #tpu.memory_space<vmem>>, vector<1x128x128xf32>
    %9 = vector.shape_cast %8 : vector<1x128x128xf32> to vector<128x128xf32>
    %cst_8 = arith.constant dense<0.000000e+00> : vector<8x128xf32>
    %10 = tpu.matmul %7, %9, %cst_8 {dimension_numbers = #tpu.dot_dimension_numbers<[1], [0], [0], [1], [0, 0, 1, 1], [], []>} : vector<8x128xf32>, vector<128x128xf32>, vector<8x128xf32> -> vector<8x128xf32>
    %c1_9 = arith.constant 1 : index
    %c0_10 = arith.constant 0 : index
    %11 = vector.load %arg3[%c1_9, %c0_10] : memref<8x128xf32, #tpu.memory_space<vmem>>, vector<1x128xf32>
    %12 = vector.broadcast %11 : vector<1x128xf32> to vector<8x128xf32>
    %13 = arith.addf %10, %12 : vector<8x128xf32>
    %14 = math.tanh %13 : vector<8x128xf32>
    %c2 = arith.constant 2 : index
    %c0_11 = arith.constant 0 : index
    %c0_12 = arith.constant 0 : index
    %15 = vector.load %arg2[%c2, %c0_11, %c0_12] : memref<3x128x128xf32, #tpu.memory_space<vmem>>, vector<1x128x128xf32>
    %16 = vector.shape_cast %15 : vector<1x128x128xf32> to vector<128x128xf32>
    %cst_13 = arith.constant dense<0.000000e+00> : vector<8x128xf32>
    %17 = tpu.matmul %14, %16, %cst_13 {dimension_numbers = #tpu.dot_dimension_numbers<[1], [0], [0], [1], [0, 0, 1, 1], [], []>} : vector<8x128xf32>, vector<128x128xf32>, vector<8x128xf32> -> vector<8x128xf32>
    %c2_14 = arith.constant 2 : index
    %c0_15 = arith.constant 0 : index
    %18 = vector.load %arg3[%c2_14, %c0_15] : memref<8x128xf32, #tpu.memory_space<vmem>>, vector<1x128xf32>
    %19 = vector.broadcast %18 : vector<1x128xf32> to vector<8x128xf32>
    %20 = arith.addf %17, %19 : vector<8x128xf32>
    %cst_16 = arith.constant dense<0xFF800000> : vector<8xf32>
    %21 = vector.multi_reduction <maximumf>, %20, %cst_16 [1] : vector<8x128xf32> to vector<8xf32>
    %22 = vector.shape_cast %21 : vector<8xf32> to vector<8x1xf32>
    %23 = vector.broadcast %22 : vector<8x1xf32> to vector<8x128xf32>
    %24 = arith.subf %20, %23 : vector<8x128xf32>
    %25 = math.exp %24 : vector<8x128xf32>
    %cst_17 = arith.constant dense<0.000000e+00> : vector<8xf32>
    %26 = vector.multi_reduction <add>, %25, %cst_17 [1] : vector<8x128xf32> to vector<8xf32>
    %27 = vector.shape_cast %26 : vector<8xf32> to vector<8x1xf32>
    %28 = tpu.reciprocal %27 {approx = true} : vector<8x1xf32> -> vector<8x1xf32>
    %29 = vector.broadcast %28 : vector<8x1xf32> to vector<8x128xf32>
    %30 = arith.mulf %25, %29 : vector<8x128xf32>
    %c0_18 = arith.constant 0 : index
    %c0_19 = arith.constant 0 : index
    %31 = vector.load %arg4[%c0_18, %c0_19] : memref<8x128xf32, #tpu.memory_space<vmem>>, vector<8x128xf32>
    tpu.vector_store %arg4[%c0_18, %c0_19], %30 {strides = array<i32>} : memref<8x128xf32, #tpu.memory_space<vmem>>, vector<8x128xf32>,
    return
  }
  func.func @transform_0(%arg0: i32) -> (i32, i32) {
    %c0_i32 = arith.constant 0 : i32
    %c0_i32_0 = arith.constant 0 : i32
    return %arg0, %c0_i32 : i32, i32
  }
  func.func @transform_1(%arg0: i32) -> (i32, i32, i32) {
    %c0_i32 = arith.constant 0 : i32
    %c0_i32_0 = arith.constant 0 : i32
    %c0_i32_1 = arith.constant 0 : i32
    %c0_i32_2 = arith.constant 0 : i32
    return %c0_i32, %c0_i32_0, %c0_i32_1 : i32, i32, i32
  }
  func.func @transform_2(%arg0: i32) -> (i32, i32) {
    %c0_i32 = arith.constant 0 : i32
    %c0_i32_0 = arith.constant 0 : i32
    %c0_i32_1 = arith.constant 0 : i32
    return %c0_i32, %c0_i32_0 : i32, i32
  }
  func.func @transform_3(%arg0: i32) -> (i32, i32) {
    %c0_i32 = arith.constant 0 : i32
    %c0_i32_0 = arith.constant 0 : i32
    return %arg0, %c0_i32 : i32, i32
  }
}

</mosaic_0001>

<llo_original>
// kernel: tpu_custom_call.1
$region0: #{tpu_custom_call.1}
  #allocation0 [shape = 'u32[]', space=smem, size = 0x4, offset = 0x4, fixed_abs, tag = 'smem constant byte address 0x4 - core index']
  #allocation1 [shape = 'u32[144,128]{1,0:T(1,128)}', space=vmem, size = 0x12000, scoped, tag = 'internal scratch']
  %s0 = inlined_call_operand.hbm [shape: f32[8,128], index: 0, kind: input, shape index: {}]
  %s1 = inlined_call_operand.hbm [shape: f32[3,128,128], index: 1, kind: input, shape index: {}]
  %s2 = inlined_call_operand.hbm [shape: f32[8,128], index: 2, kind: input, shape index: {}]
  %s3 = inlined_call_operand.hbm [shape: f32[8,128], index: 3, kind: output, shape index: {}]
  %s4 = sld [smem:[#allocation0]]
  $region34: #{tpu_custom_call.1} parent=0
    _
  %s6 = ssub.s32 1, %s4
  %s7 = scalar_select 0, %s6, %s4
  $region1: #{tpu_custom_call.1} parent=0
    #allocation2 [shape = 'u8[4096]{0}', space=vmem, size = 0x1000, scoped, tag = 'input window, operand 0, single buffered']
    #allocation3 [shape = 's32[1]{0}', space=sflag, size = 0x4, scoped, tag = 'scoped memory for tpu_custom_call.1']
    #allocation4 [shape = 's32[1]{0}', space=sflag, size = 0x4, scoped, tag = 'scoped memory for tpu_custom_call.1']
    #allocation5 [shape = 'u8[196608]{0}', space=vmem, size = 0x30000, scoped, tag = 'input window, operand 1, single buffered']
    #allocation6 [shape = 's32[1]{0}', space=sflag, size = 0x4, scoped, tag = 'scoped memory for tpu_custom_call.1']
    #allocation7 [shape = 'u8[4096]{0}', space=vmem, size = 0x1000, scoped, tag = 'input window, operand 2, single buffered']
    #allocation8 [shape = 'u8[4096]{0}', space=vmem, size = 0x1000, scoped, tag = 'output window, operand 0, single buffered']
    %8 = vsyncpa [#allocation3], 0
    %9 = vsyncpa [#allocation6], 0
    %10 = vsyncpa [#allocation4], 0
    // Predicated region
    $region2: #{tpu_custom_call.1} parent=1 // pred_check
      _
    $region3: #{tpu_custom_call.1} parent=1 // pred_check_branch
      %12 = sbr.rel (0) target = $region5
    $region4: #{tpu_custom_call.1} parent=1 // pred_region
      %s14 = ssub.s32 128, 128
      %15 = vsyncadd [#allocation3], %s14
      %s17 = sshll.u32 [#allocation2], 4
      %s18 = int_to_ptr.vmem [resolvable:$true] %s17
      %20 = dma.hbm_to_vmem [thread:$0]  %s0, 128, %s18, [#allocation3]
    $region5: #{tpu_custom_call.1} parent=1 // pred_fallthru
      _
    // Predicated region
    $region6: #{tpu_custom_call.1} parent=1 // pred_check
      _
    $region7: #{tpu_custom_call.1} parent=1 // pred_check_branch
      %22 = sbr.rel (0) target = $region9
    $region8: #{tpu_custom_call.1} parent=1 // pred_region
      %s24 = ssub.s32 6144, 6144
      %25 = vsyncadd [#allocation6], %s24
      %s26 = sshll.u32 [#allocation5], 4
      %s27 = int_to_ptr.vmem [resolvable:$true] %s26
      %32 = dma.hbm_to_vmem [thread:$0]  %s1, 6144, %s27, [#allocation6], 128, 128, 8
    $region9: #{tpu_custom_call.1} parent=1 // pred_fallthru
      _
    // Predicated region
    $region10: #{tpu_custom_call.1} parent=1 // pred_check
      _
    $region11: #{tpu_custom_call.1} parent=1 // pred_check_branch
      %34 = sbr.rel (0) target = $region13
    $region12: #{tpu_custom_call.1} parent=1 // pred_region
      %s36 = ssub.s32 128, 128
      %37 = vsyncadd [#allocation6], %s36
      %s39 = sshll.u32 [#allocation7], 4
      %s40 = int_to_ptr.vmem [resolvable:$true] %s39
      %42 = dma.hbm_to_vmem [thread:$0]  %s2, 128, %s40, [#allocation6]
    $region13: #{tpu_custom_call.1} parent=1 // pred_fallthru
      _
    // Predicated region
    $region14: #{tpu_custom_call.1} parent=1 // pred_check
      _
    $region15: #{tpu_custom_call.1} parent=1 // pred_check_branch
      %44 = sbr.rel (0) target = $region17
    $region16: #{tpu_custom_call.1} parent=1 // pred_region
      %45 = dma.done [#allocation3], 128
    $region17: #{tpu_custom_call.1} parent=1 // pred_fallthru
      _
    // Predicated region
    $region18: #{tpu_custom_call.1} parent=1 // pred_check
      _
    $region19: #{tpu_custom_call.1} parent=1 // pred_check_branch
      %47 = sbr.rel (0) target = $region21
    $region20: #{tpu_custom_call.1} parent=1 // pred_region
      %48 = dma.done [#allocation6], 6144
    $region21: #{tpu_custom_call.1} parent=1 // pred_fallthru
      _
    // Predicated region
    $region22: #{tpu_custom_call.1} parent=1 // pred_check
      _
    $region23: #{tpu_custom_call.1} parent=1 // pred_check_branch
      %50 = sbr.rel (0) target = $region25
    $region24: #{tpu_custom_call.1} parent=1 // pred_region
      %51 = dma.done [#allocation6], 128
    $region25: #{tpu_custom_call.1} parent=1 // pred_fallthru
      _
    %v52 = vld [vmem:[#allocation2] sm:$0xff]
    %v53 = vld [vmem:[#allocation5] sm:$0xff]
    %v54 = vld [vmem:[#allocation5 + $0x8] sm:$0xff]
    %v55 = vld [vmem:[#allocation5 + $0x10] sm:$0xff]
    %v56 = vld [vmem:[#allocation5 + $0x18] sm:$0xff]
    %v57 = vld [vmem:[#allocation5 + $0x20] sm:$0xff]
    %v58 = vld [vmem:[#allocation5 + $0x28] sm:$0xff]
    %v59 = vld [vmem:[#allocation5 + $0x30] sm:$0xff]
    %v60 = vld [vmem:[#allocation5 + $0x38] sm:$0xff]
    %v61 = vld [vmem:[#allocation5 + $0x40] sm:$0xff]
    %v62 = vld [vmem:[#allocation5 + $0x48] sm:$0xff]
    %v63 = vld [vmem:[#allocation5 + $0x50] sm:$0xff]
    %v64 = vld [vmem:[#allocation5 + $0x58] sm:$0xff]
    %v65 = vld [vmem:[#allocation5 + $0x60] sm:$0xff]
    %v66 = vld [vmem:[#allocation5 + $0x68] sm:$0xff]
    %v67 = vld [vmem:[#allocation5 + $0x70] sm:$0xff]
    %v68 = vld [vmem:[#allocation5 + $0x78] sm:$0xff]
    %v69 = vld [vmem:[#allocation7] sm:$0x1]
    %v70 = vlaneseq
    %v71 = vshrl.u32 %v70, 7
    %v72 = vsub.s32 0, %v71
    %v73 = vrot.slane %v69, %v72
    %74 = vmatprep.subr.mxu0 0.0
    %75 = vmatpush1.msra.mxu0 %v68
    %76 = vmatprep.subr.mxu0 0.0
    %77 = vmatpush1.msra.mxu0 %v67
    %78 = vmatprep.subr.mxu0 0.0
    %79 = vmatpush1.msra.mxu0 %v66
    %80 = vmatprep.subr.mxu0 0.0
    %81 = vmatpush1.msra.mxu0 %v65
    %82 = vmatprep.subr.mxu0 0.0
    %83 = vmatpush1.msra.mxu0 %v64
    %84 = vmatprep.subr.mxu0 0.0
    %85 = vmatpush1.msra.mxu0 %v63
    %86 = vmatprep.subr.mxu0 0.0
    %87 = vmatpush1.msra.mxu0 %v62
    %88 = vmatprep.subr.mxu0 0.0
    %89 = vmatpush1.msra.mxu0 %v61
    %90 = vmatprep.subr.mxu0 0.0
    %91 = vmatpush1.msra.mxu0 %v60
    %92 = vmatprep.subr.mxu0 0.0
    %93 = vmatpush1.msra.mxu0 %v59
    %94 = vmatprep.subr.mxu0 0.0
    %95 = vmatpush1.msra.mxu0 %v58
    %96 = vmatprep.subr.mxu0 0.0
    %97 = vmatpush1.msra.mxu0 %v57
    %98 = vmatprep.subr.mxu0 0.0
    %99 = vmatpush1.msra.mxu0 %v56
    %100 = vmatprep.subr.mxu0 0.0
    %101 = vmatpush1.msra.mxu0 %v55
    %102 = vmatprep.subr.mxu0 0.0
    %103 = vmatpush1.msra.mxu0 %v54
    %104 = vmatprep.subr.mxu0 0.0
    %105 = vmatpush1.msra.mxu0 %v53
    %106 = vmatprep.subr.mxu0 0.0
    %107 = vmatpush2.msra.mxu0 0.0
    %108 = vmatprep.subr.mxu0 0.0
    %109 = vmatpush2.msra.mxu0 0.0
    %110 = vmatprep.subr.mxu0 0.0
    %111 = vmatpush2.msra.mxu0 0.0
    %112 = vmatprep.subr.mxu0 0.0
    %113 = vmatpush2.msra.mxu0 0.0
    %114 = vmatprep.subr.mxu0 0.0
    %115 = vmatpush2.msra.mxu0 0.0
    %116 = vmatprep.subr.mxu0 0.0
    %117 = vmatpush2.msra.mxu0 0.0
    %118 = vmatprep.subr.mxu0 0.0
    %119 = vmatpush2.msra.mxu0 0.0
    %120 = vmatprep.subr.mxu0 0.0
    %121 = vmatpush2.msra.mxu0 0.0
    %122 = vmatprep.subr.mxu0 0.0
    %123 = vmatpush2.msra.mxu0 0.0
    %124 = vmatprep.subr.mxu0 0.0
    %125 = vmatpush2.msra.mxu0 0.0
    %126 = vmatprep.subr.mxu0 0.0
    %127 = vmatpush2.msra.mxu0 0.0
    %128 = vmatprep.subr.mxu0 0.0
    %129 = vmatpush2.msra.mxu0 0.0
    %130 = vmatprep.subr.mxu0 0.0
    %131 = vmatpush2.msra.mxu0 0.0
    %132 = vmatprep.subr.mxu0 0.0
    %133 = vmatpush2.msra.mxu0 0.0
    %134 = vmatprep.subr.mxu0 0.0
    %135 = vmatpush2.msra.mxu0 0.0
    %136 = vmatprep.subr.mxu0 0.0
    %137 = vmatpush2.msra.mxu0 0.0
    %138 = vmatprep.mubr.f32.mxu0 0.0
    %139 = vmatmul.mubr.f32.gmra.mxu0 %v52
    %v140 = vpop.f32.mrf.mxu0
    %v141 = vadd.f32 %v73, %v140
    %v142 = vpop.f32.mrf.mxu0
    %143 = vdwg.mxu0
    %v144 = vtanh.pop %v141
    %s145 = scalar_lea.vmem [#allocation5], 128
    %v146 = vld [vmem:[%s145] sm:$0xff]
    %v147 = vld [vmem:[%s145 + $0x8] sm:$0xff]
    %v148 = vld [vmem:[%s145 + $0x10] sm:$0xff]
    %v149 = vld [vmem:[%s145 + $0x18] sm:$0xff]
    %v150 = vld [vmem:[%s145 + $0x20] sm:$0xff]
    %v151 = vld [vmem:[%s145 + $0x28] sm:$0xff]
    %v152 = vld [vmem:[%s145 + $0x30] sm:$0xff]
    %v153 = vld [vmem:[%s145 + $0x38] sm:$0xff]
    %v154 = vld [vmem:[%s145 + $0x40] sm:$0xff]
    %v155 = vld [vmem:[%s145 + $0x48] sm:$0xff]
    %v156 = vld [vmem:[%s145 + $0x50] sm:$0xff]
    %v157 = vld [vmem:[%s145 + $0x58] sm:$0xff]
    %v158 = vld [vmem:[%s145 + $0x60] sm:$0xff]
    %v159 = vld [vmem:[%s145 + $0x68] sm:$0xff]
    %v160 = vld [vmem:[%s145 + $0x70] sm:$0xff]
    %v161 = vld [vmem:[%s145 + $0x78] sm:$0xff]
    %v162 = vld [vmem:[#allocation7 + $0x1] sm:$0x1]
    %v163 = vlaneseq
    %v164 = vshrl.u32 %v163, 7
    %v165 = vsub.s32 0, %v164
    %v166 = vrot.slane %v162, %v165
    %167 = vmatprep.subr.mxu0 0.0
    %168 = vmatpush1.msra.mxu0 %v161
    %169 = vmatprep.subr.mxu0 0.0
    %170 = vmatpush1.msra.mxu0 %v160
    %171 = vmatprep.subr.mxu0 0.0
    %172 = vmatpush1.msra.mxu0 %v159
    %173 = vmatprep.subr.mxu0 0.0
    %174 = vmatpush1.msra.mxu0 %v158
    %175 = vmatprep.subr.mxu0 0.0
    %176 = vmatpush1.msra.mxu0 %v157
    %177 = vmatprep.subr.mxu0 0.0
    %178 = vmatpush1.msra.mxu0 %v156
    %179 = vmatprep.subr.mxu0 0.0
    %180 = vmatpush1.msra.mxu0 %v155
    %181 = vmatprep.subr.mxu0 0.0
    %182 = vmatpush1.msra.mxu0 %v154
    %183 = vmatprep.subr.mxu0 0.0
    %184 = vmatpush1.msra.mxu0 %v153
    %185 = vmatprep.subr.mxu0 0.0
    %186 = vmatpush1.msra.mxu0 %v152
    %187 = vmatprep.subr.mxu0 0.0
    %188 = vmatpush1.msra.mxu0 %v151
    %189 = vmatprep.subr.mxu0 0.0
    %190 = vmatpush1.msra.mxu0 %v150
    %191 = vmatprep.subr.mxu0 0.0
    %192 = vmatpush1.msra.mxu0 %v149
    %193 = vmatprep.subr.mxu0 0.0
    %194 = vmatpush1.msra.mxu0 %v148
    %195 = vmatprep.subr.mxu0 0.0
    %196 = vmatpush1.msra.mxu0 %v147
    %197 = vmatprep.subr.mxu0 0.0
    %198 = vmatpush1.msra.mxu0 %v146
    %199 = vmatprep.subr.mxu0 0.0
    %200 = vmatpush2.msra.mxu0 0.0
    %201 = vmatprep.subr.mxu0 0.0
    %202 = vmatpush2.msra.mxu0 0.0
    %203 = vmatprep.subr.mxu0 0.0
    %204 = vmatpush2.msra.mxu0 0.0
    %205 = vmatprep.subr.mxu0 0.0
    %206 = vmatpush2.msra.mxu0 0.0
    %207 = vmatprep.subr.mxu0 0.0
    %208 = vmatpush2.msra.mxu0 0.0
    %209 = vmatprep.subr.mxu0 0.0
    %210 = vmatpush2.msra.mxu0 0.0
    %211 = vmatprep.subr.mxu0 0.0
    %212 = vmatpush2.msra.mxu0 0.0
    %213 = vmatprep.subr.mxu0 0.0
    %214 = vmatpush2.msra.mxu0 0.0
    %215 = vmatprep.subr.mxu0 0.0
    %216 = vmatpush2.msra.mxu0 0.0
    %217 = vmatprep.subr.mxu0 0.0
    %218 = vmatpush2.msra.mxu0 0.0
    %219 = vmatprep.subr.mxu0 0.0
    %220 = vmatpush2.msra.mxu0 0.0
    %221 = vmatprep.subr.mxu0 0.0
    %222 = vmatpush2.msra.mxu0 0.0
    %223 = vmatprep.subr.mxu0 0.0
    %224 = vmatpush2.msra.mxu0 0.0
    %225 = vmatprep.subr.mxu0 0.0
    %226 = vmatpush2.msra.mxu0 0.0
    %227 = vmatprep.subr.mxu0 0.0
    %228 = vmatpush2.msra.mxu0 0.0
    %229 = vmatprep.subr.mxu0 0.0
    %230 = vmatpush2.msra.mxu0 0.0
    %231 = vmatprep.mubr.f32.mxu0 0.0
    %232 = vmatmul.mubr.f32.gmra.mxu0 %v144
    %v233 = vpop.f32.mrf.mxu0
    %v234 = vadd.f32 %v166, %v233
    %v235 = vpop.f32.mrf.mxu0
    %236 = vdwg.mxu0
    %v237 = vtanh.pop %v234
    %s238 = scalar_lea.vmem [#allocation5], 256
    %v239 = vld [vmem:[%s238] sm:$0xff]
    %v240 = vld [vmem:[%s238 + $0x8] sm:$0xff]
    %v241 = vld [vmem:[%s238 + $0x10] sm:$0xff]
    %v242 = vld [vmem:[%s238 + $0x18] sm:$0xff]
    %v243 = vld [vmem:[%s238 + $0x20] sm:$0xff]
    %v244 = vld [vmem:[%s238 + $0x28] sm:$0xff]
    %v245 = vld [vmem:[%s238 + $0x30] sm:$0xff]
    %v246 = vld [vmem:[%s238 + $0x38] sm:$0xff]
    %v247 = vld [vmem:[%s238 + $0x40] sm:$0xff]
    %v248 = vld [vmem:[%s238 + $0x48] sm:$0xff]
    %v249 = vld [vmem:[%s238 + $0x50] sm:$0xff]
    %v250 = vld [vmem:[%s238 + $0x58] sm:$0xff]
    %v251 = vld [vmem:[%s238 + $0x60] sm:$0xff]
    %v252 = vld [vmem:[%s238 + $0x68] sm:$0xff]
    %v253 = vld [vmem:[%s238 + $0x70] sm:$0xff]
    %v254 = vld [vmem:[%s238 + $0x78] sm:$0xff]
    %v255 = vld [vmem:[#allocation7 + $0x2] sm:$0x1]
    %v256 = vlaneseq
    %v257 = vshrl.u32 %v256, 7
    %v258 = vsub.s32 0, %v257
    %v259 = vrot.slane %v255, %v258
    %260 = vmatprep.subr.mxu0 0.0
    %261 = vmatpush1.msra.mxu0 %v254
    %262 = vmatprep.subr.mxu0 0.0
    %263 = vmatpush1.msra.mxu0 %v253
    %264 = vmatprep.subr.mxu0 0.0
    %265 = vmatpush1.msra.mxu0 %v252
    %266 = vmatprep.subr.mxu0 0.0
    %267 = vmatpush1.msra.mxu0 %v251
    %268 = vmatprep.subr.mxu0 0.0
    %269 = vmatpush1.msra.mxu0 %v250
    %270 = vmatprep.subr.mxu0 0.0
    %271 = vmatpush1.msra.mxu0 %v249
    %272 = vmatprep.subr.mxu0 0.0
    %273 = vmatpush1.msra.mxu0 %v248
    %274 = vmatprep.subr.mxu0 0.0
    %275 = vmatpush1.msra.mxu0 %v247
    %276 = vmatprep.subr.mxu0 0.0
    %277 = vmatpush1.msra.mxu0 %v246
    %278 = vmatprep.subr.mxu0 0.0
    %279 = vmatpush1.msra.mxu0 %v245
    %280 = vmatprep.subr.mxu0 0.0
    %281 = vmatpush1.msra.mxu0 %v244
    %282 = vmatprep.subr.mxu0 0.0
    %283 = vmatpush1.msra.mxu0 %v243
    %284 = vmatprep.subr.mxu0 0.0
    %285 = vmatpush1.msra.mxu0 %v242
    %286 = vmatprep.subr.mxu0 0.0
    %287 = vmatpush1.msra.mxu0 %v241
    %288 = vmatprep.subr.mxu0 0.0
    %289 = vmatpush1.msra.mxu0 %v240
    %290 = vmatprep.subr.mxu0 0.0
    %291 = vmatpush1.msra.mxu0 %v239
    %292 = vmatprep.subr.mxu0 0.0
    %293 = vmatpush2.msra.mxu0 0.0
    %294 = vmatprep.subr.mxu0 0.0
    %295 = vmatpush2.msra.mxu0 0.0
    %296 = vmatprep.subr.mxu0 0.0
    %297 = vmatpush2.msra.mxu0 0.0
    %298 = vmatprep.subr.mxu0 0.0
    %299 = vmatpush2.msra.mxu0 0.0
    %300 = vmatprep.subr.mxu0 0.0
    %301 = vmatpush2.msra.mxu0 0.0
    %302 = vmatprep.subr.mxu0 0.0
    %303 = vmatpush2.msra.mxu0 0.0
    %304 = vmatprep.subr.mxu0 0.0
    %305 = vmatpush2.msra.mxu0 0.0
    %306 = vmatprep.subr.mxu0 0.0
    %307 = vmatpush2.msra.mxu0 0.0
    %308 = vmatprep.subr.mxu0 0.0
    %309 = vmatpush2.msra.mxu0 0.0
    %310 = vmatprep.subr.mxu0 0.0
    %311 = vmatpush2.msra.mxu0 0.0
    %312 = vmatprep.subr.mxu0 0.0
    %313 = vmatpush2.msra.mxu0 0.0
    %314 = vmatprep.subr.mxu0 0.0
    %315 = vmatpush2.msra.mxu0 0.0
    %316 = vmatprep.subr.mxu0 0.0
    %317 = vmatpush2.msra.mxu0 0.0
    %318 = vmatprep.subr.mxu0 0.0
    %319 = vmatpush2.msra.mxu0 0.0
    %320 = vmatprep.subr.mxu0 0.0
    %321 = vmatpush2.msra.mxu0 0.0
    %322 = vmatprep.subr.mxu0 0.0
    %323 = vmatpush2.msra.mxu0 0.0
    %324 = vmatprep.mubr.f32.mxu0 0.0
    %325 = vmatmul.mubr.f32.gmra.mxu0 %v237
    %v326 = vpop.f32.mrf.mxu0
    %v327 = vadd.f32 %v259, %v326
    %v328 = vpop.f32.mrf.mxu0
    %329 = vdwg.mxu0
    %330 = vmax.xlane.f32.xlu0 %v327
    %v331 = vpop.xlane.xlu0 %330
    %v332 = vsub.f32 %v327, %v331
    %v333 = vmul.f32 %v332, 1.442695
    %v334 = vpow.pop %v333
    %335 = vadd.xlane.f32.xlu0 %v334
    %v336 = vpop.xlane.xlu0 %335
    %v337 = vrcp.pop %v336
    %v338 = vmul.f32 %v334, %v337
    %339 = vst [vmem:[#allocation8] sm:$0xff] %v338
    // Predicated region
    $region26: #{tpu_custom_call.1} parent=1 // pred_check
      _
    $region27: #{tpu_custom_call.1} parent=1 // pred_check_branch
      %341 = sbr.rel (0) target = $region29
    $region28: #{tpu_custom_call.1} parent=1 // pred_region
      %s343 = ssub.s32 128, 128
      %344 = vsyncadd [#allocation4], %s343
      %s346 = sshll.u32 [#allocation8], 4
      %s347 = int_to_ptr.vmem [resolvable:$true] %s346
      %349 = dma.vmem_to_hbm [thread:$0]  %s347, 128, %s3, [#allocation4]
    $region29: #{tpu_custom_call.1} parent=1 // pred_fallthru
      _
    // Predicated region
    $region30: #{tpu_custom_call.1} parent=1 // pred_check
      _
    $region31: #{tpu_custom_call.1} parent=1 // pred_check_branch
      %351 = sbr.rel (0) target = $region33
    $region32: #{tpu_custom_call.1} parent=1 // pred_region
      %352 = dma.done [#allocation4], 128
    $region33: #{tpu_custom_call.1} parent=1 // pred_fallthru
      _
    %353 = vsyncpa [#allocation3], 1
    %354 = vsyncpa [#allocation6], 1
    %355 = vsyncpa [#allocation4], 1

</llo_original>
